<compile_context>
chip_gen: v6e
topology: v6e:2x2x1
jax: 0.10.0
libtpu: 0.0.40
codegen_flags: <defaults>
</compile_context>

<pallas_src>
import functools
from typing import Any, NamedTuple

import jax
import jax.numpy as jnp
from jax.experimental import pallas as pl
from jax.experimental.pallas import tpu as pltpu

_MiB = 1 << 20


def _round_up(n: int, m: int) -> int:
    return ((n + m - 1) // m) * m


def _detect_tpu_generation() -> str:
    try:
        kind = jax.devices()[0].device_kind.lower()
    except Exception:
        return "other"
    if "v6e" in kind or "v6 lite" in kind:
        return "v6e"
    if "v5e" in kind or "v5 lite" in kind:
        return "v5e"
    if "7x" in kind or "v7" in kind:
        return "v7x"
    return "other"


def _row_align(itemsize: int) -> int:
    # Full sublane packing: 8 rows per f32 vreg, 16 for 16-bit, 32 for 8-bit dtypes.
    if itemsize == 1:
        return 32
    if itemsize == 2:
        return 16
    return 8


def _vmem_bytes(tm: int, tf: int, d_model: int, csize: int) -> int:
    x_b = 2 * tm * d_model * csize            # double-buffered x tile
    w_b = 2 * 3 * tf * d_model * csize        # double-buffered W1t/W3t/W2t slabs
    o_b = 2 * tm * d_model * csize            # double-buffered output tile
    acc = tm * d_model * 4                    # f32 accumulator scratch
    inter = 4 * tm * tf * 4                   # t1/t3/sig/t4 f32 spill headroom
    return x_b + w_b + o_b + acc + inter


def _generation_defaults(gen: str, d_model: int, csize: int):
    """Returns (tm, tf, vmem_limit_bytes, lane_mult) for the detected chip."""
    if gen == "v7x":           # 64 MiB/TC VMEM, 3.2 TB/s HBM
        vmem, tm, lane = 56 * _MiB, 512, 256
    elif gen == "v6e":         # 128 MiB VMEM, 1.4 TB/s HBM -> weight-DMA bound unless TM large
        vmem, tm, lane = 100 * _MiB, 768, 256
    elif gen == "v5e":         # 128 MiB VMEM, ~820 GB/s HBM, 4x128^2 MXU
        vmem, tm, lane = 96 * _MiB, 384, 128
    else:                      # unknown chip: conservative
        vmem, tm, lane = 64 * _MiB, 256, 128
    # Weight-slab budget: 2 buffers * 3 slabs * tf * d_model * csize <= ~45% of VMEM.
    tf_budget = int(0.45 * vmem) // max(1, 6 * d_model * csize)
    tf = max(lane, (tf_budget // lane) * lane)
    tf = min(tf, 2048)
    return tm, tf, vmem, lane


class SwiGLUConfig(NamedTuple):
    d_model: int
    d_ff: int
    tm: int
    tf: int
    compute_dtype: Any
    vmem_limit_bytes: int


def _swiglu_kernel(x_ref, w1t_ref, w3t_ref, w2t_ref, o_ref, acc_ref, *, approx_recip):
    """Grid step (i, j): token tile i  x  d_ff tile j (reduction axis, last).

    x_ref   : (TM, d_model)     compute dtype
    w1t_ref : (d_model, TF)     compute dtype   (W1 pre-transposed)
    w3t_ref : (d_model, TF)     compute dtype   (W3 pre-transposed)
    w2t_ref : (TF, d_model)     compute dtype   (W2 pre-transposed)
    o_ref   : (TM, d_model)     output dtype    (written on last j only)
    acc_ref : (TM, d_model) f32 VMEM scratch, resident across the j axis
    """
    j = pl.program_id(1)

    x = x_ref[...]

    # Gate / up projections for this d_ff slice; f32 accumulation on the MXU.
    t1 = jnp.dot(x, w1t_ref[...], preferred_element_type=jnp.float32)
    t3 = jnp.dot(x, w3t_ref[...], preferred_element_type=jnp.float32)

    # Numerically-stable SiLU in f32: exp only ever sees a non-positive argument.
    # Single reciprocal (EUP) instead of two divides; approx on low-precision paths.
    pos = t1 >= 0.0
    e = jnp.exp(jnp.where(pos, -t1, t1))
    sig = jnp.where(pos, 1.0, e) * pl.reciprocal(1.0 + e, approx=approx_recip)
    t4 = (sig * t1) * t3

    # Down-projection: partial contribution of this d_ff slice to the output.
    partial = jnp.dot(t4.astype(w2t_ref.dtype), w2t_ref[...],
                      preferred_element_type=jnp.float32)

    @pl.when(j == 0)
    def _first():
        acc_ref[...] = partial          # direct store: no zero-init + add

    @pl.when(j != 0)
    def _rest():
        acc_ref[...] += partial

    @pl.when(j == pl.num_programs(1) - 1)
    def _finalize():
        o_ref[...] = acc_ref[...].astype(o_ref.dtype)


def prepare_swiglu_weights(w1, w3, w2, *, compute_dtype=jnp.bfloat16,
                           tm=None, tf=None, vmem_limit_bytes=None):
    """One-time weight layout change (transpose + cast + pad) + tile selection.

    Call this ONCE at parameter-init time and reuse the result across forward calls.
    w1/w3: (d_ff, d_model); w2: (d_model, d_ff)  [PyTorch module storage layouts].
    Returns (w1t, w3t, w2t, cfg) to pass to swiglu_feedforward_prepared.
    """
    d_ff, d_model = w1.shape
    assert w3.shape == (d_ff, d_model) and w2.shape == (d_model, d_ff)

    cdt = jnp.dtype(compute_dtype)
    csize = cdt.itemsize
    ralign = _row_align(csize)

    gen = _detect_tpu_generation()
    tm_d, tf_d, vmem_d, lane = _generation_defaults(gen, d_model, csize)
    tm = tm_d if tm is None else tm
    tf = tf_d if tf is None else tf
    vmem_limit = vmem_d if vmem_limit_bytes is None else vmem_limit_bytes

    # Fit the full working set under ~90% of the VMEM budget; keep TM (MXU work per
    # weight byte) and shrink TF first.
    budget = int(0.9 * vmem_limit)
    while tf > lane and _vmem_bytes(tm, tf, d_model, csize) > budget:
        tf -= lane
    while tm > ralign and _vmem_bytes(tm, tf, d_model, csize) > budget:
        tm = max(ralign, _round_up(tm // 2, ralign))

    # Small d_ff: one reduction tile, no padding.
    if d_ff <= tf:
        tf = d_ff
    dff_pad = _round_up(d_ff, tf)

    # One-time layout change: the kernel never transposes.
    w1t = jnp.transpose(w1).astype(cdt)     # (d_model, d_ff)
    w3t = jnp.transpose(w3).astype(cdt)     # (d_model, d_ff)
    w2t = jnp.transpose(w2).astype(cdt)     # (d_ff, d_model)
    if dff_pad != d_ff:
        w1t = jnp.pad(w1t, ((0, 0), (0, dff_pad - d_ff)))
        w3t = jnp.pad(w3t, ((0, 0), (0, dff_pad - d_ff)))
        w2t = jnp.pad(w2t, ((0, dff_pad - d_ff), (0, 0)))

    cfg = SwiGLUConfig(d_model=d_model, d_ff=d_ff, tm=tm, tf=tf,
                       compute_dtype=cdt, vmem_limit_bytes=vmem_limit)
    return w1t, w3t, w2t, cfg


def swiglu_feedforward_prepared(x, w1t, w3t, w2t, cfg: SwiGLUConfig):
    """Hot-path forward. x: (..., d_model); weights already transposed/cast/padded."""
    out_dtype = x.dtype
    d_model = cfg.d_model
    cdt = cfg.compute_dtype
    csize = jnp.dtype(cdt).itemsize
    ralign = _row_align(csize)

    lead_shape = x.shape[:-1]
    x2d = x.reshape(-1, d_model)
    n_tok = x2d.shape[0]

    # Token (row) tiling: multiple of the packed sublane count, zero-padded.
    tm_eff = min(cfg.tm, _round_up(n_tok, ralign))
    n_pad = _round_up(n_tok, tm_eff)
    if n_pad != n_tok:
        x2d = jnp.pad(x2d, ((0, n_pad - n_tok), (0, 0)))
    x2d = x2d.astype(cdt)

    dff_pad = w1t.shape[1]
    tf = cfg.tf
    grid = (n_pad // tm_eff, dff_pad // tf)
    n_row_tiles = grid[0]

    kernel = functools.partial(
        _swiglu_kernel,
        approx_recip=bool(jnp.dtype(cdt) != jnp.dtype(jnp.float32)),
    )

    cost = pl.CostEstimate(
        flops=6 * n_pad * d_model * dff_pad,
        transcendentals=2 * n_pad * dff_pad,
        bytes_accessed=(x2d.size * csize
                        + n_row_tiles * (w1t.size + w3t.size + w2t.size) * csize
                        + n_pad * d_model * jnp.dtype(out_dtype).itemsize),
    )

    out2d = pl.pallas_call(
        kernel,
        out_shape=jax.ShapeDtypeStruct((n_pad, d_model), out_dtype),
        grid_spec=pltpu.PrefetchScalarGridSpec(
            num_scalar_prefetch=0,
            grid=grid,
            in_specs=[
                pl.BlockSpec((tm_eff, d_model), lambda i, j: (i, 0)),   # x token tile
                pl.BlockSpec((d_model, tf), lambda i, j: (0, j)),       # W1.T slab
                pl.BlockSpec((d_model, tf), lambda i, j: (0, j)),       # W3.T slab
                pl.BlockSpec((tf, d_model), lambda i, j: (j, 0)),       # W2.T slab
            ],
            out_specs=pl.BlockSpec((tm_eff, d_model), lambda i, j: (i, 0)),
            scratch_shapes=[pltpu.VMEM((tm_eff, d_model), jnp.float32)],
        ),
        compiler_params=pltpu.CompilerParams(
            dimension_semantics=("parallel", "arbitrary"),
            vmem_limit_bytes=cfg.vmem_limit_bytes,
        ),
        cost_estimate=cost,
    )(x2d, w1t, w3t, w2t)

    return out2d[:n_tok].reshape(*lead_shape, d_model)


def swiglu_feedforward(x, w1, w3, w2, *, compute_dtype=jnp.bfloat16,
                       tm=None, tf=None, vmem_limit_bytes=None):
    """Convenience wrapper (testing / one-off use): re-does the weight layout change
    on every call.  For production, call prepare_swiglu_weights() once and reuse
    swiglu_feedforward_prepared()."""
    w1t, w3t, w2t, cfg = prepare_swiglu_weights(
        w1, w3, w2, compute_dtype=compute_dtype, tm=tm, tf=tf,
        vmem_limit_bytes=vmem_limit_bytes)
    return swiglu_feedforward_prepared(x, w1t, w3t, w2t, cfg)


def _init_linear_weight(key, in_features, out_features, dtype=jnp.float32):
    """Matches the module's Linear init: weight [in_features, out_features],
    trunc_normal(mean=0, std=sqrt(2/(in+out)), a=-3*std, b=3*std)."""
    std = jnp.sqrt(2.0 / (in_features + out_features)).astype(dtype)
    w = jax.random.truncated_normal(
        key, lower=-3.0, upper=3.0, shape=(in_features, out_features), dtype=dtype
    )
    return w * std


def _reference_swiglu(x, w1, w3, w2):
    t1 = jnp.einsum("...d,fd->...f", x, w1)
    t3 = jnp.einsum("...d,fd->...f", x, w3)
    t2 = jax.nn.sigmoid(t1) * t1
    t4 = t2 * t3
    return jnp.einsum("...f,df->...d", t4, w2)


if __name__ == "__main__":
    batch, seq = 2, 8
    d_model, d_ff = 32, 64

    key = jax.random.PRNGKey(0)
    kx, k1, k2, k3, kx2 = jax.random.split(key, 5)

    x = jax.random.normal(kx, (batch, seq, d_model), dtype=jnp.float32)

    # Module: w1 = Linear(d_ff, d_model) -> weight [d_ff, d_model]
    #         w2 = Linear(d_model, d_ff) -> weight [d_model, d_ff]
    #         w3 = Linear(d_ff, d_model) -> weight [d_ff, d_model]
    w1 = _init_linear_weight(k1, d_ff, d_model)
    w2 = _init_linear_weight(k2, d_model, d_ff)
    w3 = _init_linear_weight(k3, d_ff, d_model)

    ref = _reference_swiglu(x, w1, w3, w2)

    # 1) f32 compute path (exact reciprocal): must match the reference tightly.
    p32 = prepare_swiglu_weights(w1, w3, w2, compute_dtype=jnp.float32)
    out32 = jax.block_until_ready(swiglu_feedforward_prepared(x, *p32))
    assert out32.shape == (batch, seq, d_model)
    assert jnp.allclose(out32, ref, atol=1e-5, rtol=1e-5), "f32 path mismatch vs reference"

    # 2) Default bf16 compute path (MXU-native; weights prepared once, reused).
    pbf = prepare_swiglu_weights(w1, w3, w2)            # compute_dtype defaults to bf16
    out_bf16 = jax.block_until_ready(swiglu_feedforward_prepared(x, *pbf))
    rel_err = jnp.max(jnp.abs(out_bf16.astype(jnp.float32) - ref)) / (
        jnp.max(jnp.abs(ref)) + 1e-12)
    assert rel_err < 5e-2, f"bf16 path relative error too large: {rel_err}"

    # 3) Ragged token count (15 tokens), convenience wrapper, f32 exactness.
    x2 = jax.random.normal(kx2, (3, 5, d_model), dtype=jnp.float32)
    out2 = jax.block_until_ready(
        swiglu_feedforward(x2, w1, w3, w2, compute_dtype=jnp.float32))
    ref2 = _reference_swiglu(x2, w1, w3, w2)
    assert out2.shape == (3, 5, d_model)
    assert jnp.allclose(out2, ref2, atol=1e-5, rtol=1e-5), "ragged path mismatch"

    # 4) Reuse of the prepared bf16 weights with a different batch (no re-transpose).
    out2_bf16 = jax.block_until_ready(swiglu_feedforward_prepared(x2, *pbf))
    rel_err2 = jnp.max(jnp.abs(out2_bf16.astype(jnp.float32) - ref2)) / (
        jnp.max(jnp.abs(ref2)) + 1e-12)
    assert rel_err2 < 5e-2, f"bf16 ragged relative error too large: {rel_err2}"

    print("KERNEL_OK")
</pallas_src>

<mosaic_0001>
module attributes {stable_mosaic.version = 11 : i64} {
  func.func @_swiglu_kernel(%arg0: i32, %arg1: i32, %arg2: memref<16x32xf32, #tpu.memory_space<vmem>>, %arg3: memref<32x64xf32, #tpu.memory_space<vmem>>, %arg4: memref<32x64xf32, #tpu.memory_space<vmem>>, %arg5: memref<64x32xf32, #tpu.memory_space<vmem>>, %arg6: memref<16x32xf32, #tpu.memory_space<vmem>>, %arg7: memref<16x32xf32, #tpu.memory_space<vmem>>) attributes {dimension_semantics = [#tpu.dimension_semantics<parallel>, #tpu.dimension_semantics<arbitrary>], iteration_bounds = array<i64: 1, 1>, scalar_prefetch = 0 : i64, scratch_operands = 1 : i64, tpu.core_type = #tpu.core_type<tc>, window_params = [{transform_indices = @transform_0, window_bounds = array<i64: 16, 32>}, {transform_indices = @transform_1, window_bounds = array<i64: 32, 64>}, {transform_indices = @transform_2, window_bounds = array<i64: 32, 64>}, {transform_indices = @transform_3, window_bounds = array<i64: 64, 32>}, {transform_indices = @transform_4, window_bounds = array<i64: 16, 32>}]} {
    %c0 = arith.constant 0 : index
    %c0_0 = arith.constant 0 : index
    %0 = vector.load %arg2[%c0, %c0_0] : memref<16x32xf32, #tpu.memory_space<vmem>>, vector<16x32xf32>
    %c0_1 = arith.constant 0 : index
    %c0_2 = arith.constant 0 : index
    %1 = vector.load %arg3[%c0_1, %c0_2] : memref<32x64xf32, #tpu.memory_space<vmem>>, vector<32x64xf32>
    %cst = arith.constant dense<0.000000e+00> : vector<16x64xf32>
    %2 = tpu.matmul %0, %1, %cst {dimension_numbers = #tpu.dot_dimension_numbers<[1], [0], [0], [1], [0, 0, 1, 1], [], []>} : vector<16x32xf32>, vector<32x64xf32>, vector<16x64xf32> -> vector<16x64xf32>
    %c0_3 = arith.constant 0 : index
    %c0_4 = arith.constant 0 : index
    %3 = vector.load %arg4[%c0_3, %c0_4] : memref<32x64xf32, #tpu.memory_space<vmem>>, vector<32x64xf32>
    %cst_5 = arith.constant dense<0.000000e+00> : vector<16x64xf32>
    %4 = tpu.matmul %0, %3, %cst_5 {dimension_numbers = #tpu.dot_dimension_numbers<[1], [0], [0], [1], [0, 0, 1, 1], [], []>} : vector<16x32xf32>, vector<32x64xf32>, vector<16x64xf32> -> vector<16x64xf32>
    %cst_6 = arith.constant 0.000000e+00 : f32
    %5 = vector.broadcast %cst_6 : f32 to vector<16x64xf32>
    %6 = arith.cmpf oge, %2, %5 : vector<16x64xf32>
    %cst_7 = arith.constant 0.000000e+00 : f32
    %7 = vector.broadcast %cst_7 : f32 to vector<16x64xf32>
    %8 = arith.subf %7, %2 : vector<16x64xf32>
    %9 = arith.select %6, %8, %2 : vector<16x64xi1>, vector<16x64xf32>
    %10 = math.exp %9 : vector<16x64xf32>
    %cst_8 = arith.constant 1.000000e+00 : f32
    %11 = vector.broadcast %cst_8 : f32 to vector<16x64xf32>
    %12 = arith.select %6, %11, %10 : vector<16x64xi1>, vector<16x64xf32>
    %cst_9 = arith.constant 1.000000e+00 : f32
    %13 = vector.broadcast %cst_9 : f32 to vector<16x64xf32>
    %14 = arith.addf %13, %10 : vector<16x64xf32>
    %15 = tpu.reciprocal %14 : vector<16x64xf32> -> vector<16x64xf32>
    %16 = arith.mulf %12, %15 : vector<16x64xf32>
    %17 = arith.mulf %16, %2 : vector<16x64xf32>
    %18 = arith.mulf %17, %4 : vector<16x64xf32>
    %c0_10 = arith.constant 0 : index
    %c0_11 = arith.constant 0 : index
    %19 = vector.load %arg5[%c0_10, %c0_11] : memref<64x32xf32, #tpu.memory_space<vmem>>, vector<64x32xf32>
    %cst_12 = arith.constant dense<0.000000e+00> : vector<16x32xf32>
    %20 = tpu.matmul %18, %19, %cst_12 {dimension_numbers = #tpu.dot_dimension_numbers<[1], [0], [0], [1], [0, 0, 1, 1], [], []>} : vector<16x64xf32>, vector<64x32xf32>, vector<16x32xf32> -> vector<16x32xf32>
    %c0_i32 = arith.constant 0 : i32
    %21 = arith.cmpi eq, %arg1, %c0_i32 : i32
    %22 = arith.extui %21 : i1 to i32
    %c0_i32_13 = arith.constant 0 : i32
    %23 = arith.cmpi ne, %22, %c0_i32_13 : i32
    scf.if %23 {
      %c0_18 = arith.constant 0 : index
      %c0_19 = arith.constant 0 : index
      %30 = vector.load %arg7[%c0_18, %c0_19] : memref<16x32xf32, #tpu.memory_space<vmem>>, vector<16x32xf32>
      tpu.vector_store %arg7[%c0_18, %c0_19], %20 {strides = array<i32>} : memref<16x32xf32, #tpu.memory_space<vmem>>, vector<16x32xf32>,
    } else {
    }
    %c0_i32_14 = arith.constant 0 : i32
    %24 = arith.cmpi ne, %arg1, %c0_i32_14 : i32
    %25 = arith.extui %24 : i1 to i32
    %c0_i32_15 = arith.constant 0 : i32
    %26 = arith.cmpi ne, %25, %c0_i32_15 : i32
    scf.if %26 {
      %c0_18 = arith.constant 0 : index
      %c0_19 = arith.constant 0 : index
      %30 = vector.load %arg7[%c0_18, %c0_19] : memref<16x32xf32, #tpu.memory_space<vmem>>, vector<16x32xf32>
      %31 = arith.addf %30, %20 : vector<16x32xf32>
      %c0_20 = arith.constant 0 : index
      %c0_21 = arith.constant 0 : index
      %32 = vector.load %arg7[%c0_20, %c0_21] : memref<16x32xf32, #tpu.memory_space<vmem>>, vector<16x32xf32>
      tpu.vector_store %arg7[%c0_20, %c0_21], %31 {strides = array<i32>} : memref<16x32xf32, #tpu.memory_space<vmem>>, vector<16x32xf32>,
    } else {
    }
    %c0_i32_16 = arith.constant 0 : i32
    %27 = arith.cmpi eq, %arg1, %c0_i32_16 : i32
    %28 = arith.extui %27 : i1 to i32
    %c0_i32_17 = arith.constant 0 : i32
    %29 = arith.cmpi ne, %28, %c0_i32_17 : i32
    scf.if %29 {
      %c0_18 = arith.constant 0 : index
      %c0_19 = arith.constant 0 : index
      %30 = vector.load %arg7[%c0_18, %c0_19] : memref<16x32xf32, #tpu.memory_space<vmem>>, vector<16x32xf32>
      %c0_20 = arith.constant 0 : index
      %c0_21 = arith.constant 0 : index
      %31 = vector.load %arg6[%c0_20, %c0_21] : memref<16x32xf32, #tpu.memory_space<vmem>>, vector<16x32xf32>
      tpu.vector_store %arg6[%c0_20, %c0_21], %30 {strides = array<i32>} : memref<16x32xf32, #tpu.memory_space<vmem>>, vector<16x32xf32>,
    } else {
    }
    return
  }
  func.func @transform_0(%arg0: i32, %arg1: i32) -> (i32, i32) {
    %c0_i32 = arith.constant 0 : i32
    %c0_i32_0 = arith.constant 0 : i32
    return %arg0, %c0_i32 : i32, i32
  }
  func.func @transform_1(%arg0: i32, %arg1: i32) -> (i32, i32) {
    %c0_i32 = arith.constant 0 : i32
    %c0_i32_0 = arith.constant 0 : i32
    return %c0_i32, %arg1 : i32, i32
  }
  func.func @transform_2(%arg0: i32, %arg1: i32) -> (i32, i32) {
    %c0_i32 = arith.constant 0 : i32
    %c0_i32_0 = arith.constant 0 : i32
    return %c0_i32, %arg1 : i32, i32
  }
  func.func @transform_3(%arg0: i32, %arg1: i32) -> (i32, i32) {
    %c0_i32 = arith.constant 0 : i32
    %c0_i32_0 = arith.constant 0 : i32
    return %arg1, %c0_i32 : i32, i32
  }
  func.func @transform_4(%arg0: i32, %arg1: i32) -> (i32, i32) {
    %c0_i32 = arith.constant 0 : i32
    %c0_i32_0 = arith.constant 0 : i32
    return %arg0, %c0_i32 : i32, i32
  }
}

</mosaic_0001>

<llo_original>
// kernel: tpu_custom_call.1
$region0: #{tpu_custom_call.1}
  #allocation0 [shape = 'u32[]', space=smem, size = 0x4, offset = 0x4, fixed_abs, tag = 'smem constant byte address 0x4 - core index']
  #allocation1 [shape = 'u32[144,128]{1,0:T(1,128)}', space=vmem, size = 0x12000, scoped, tag = 'internal scratch']
  #allocation2 [shape = 'f32[16,32]{1,0:T(8,128)}', space=vmem, size = 0x2000, scoped, tag = 'scratch operand']
  %s0 = inlined_call_operand.vmem [shape: f32[16,32], index: 0, kind: input, shape index: {}]
  %s1 = inlined_call_operand.vmem [shape: f32[32,64], index: 1, kind: input, shape index: {}]
  %s2 = inlined_call_operand.vmem [shape: f32[32,64], index: 2, kind: input, shape index: {}]
  %s3 = inlined_call_operand.vmem [shape: f32[64,32], index: 3, kind: input, shape index: {}]
  %s4 = inlined_call_operand.hbm [shape: f32[16,32], index: 4, kind: output, shape index: {}]
  %s5 = sld [smem:[#allocation0]]
  $region38: #{tpu_custom_call.1} parent=0
    _
  %s7 = ssub.s32 1, %s5
  %s8 = scalar_select 0, %s7, %s5
  $region1: #{tpu_custom_call.1} parent=0
    #allocation3 [shape = 'u8[8192]{0}', space=vmem, size = 0x2000, scoped, tag = 'output window, operand 0, single buffered']
    #allocation4 [shape = 's32[1]{0}', space=sflag, size = 0x4, scoped, tag = 'scoped memory for tpu_custom_call.1']
    %9 = vsyncpa [#allocation4], 0
    // Predicated region
    $region2: #{tpu_custom_call.1} parent=1 // pred_check
      _
    $region3: #{tpu_custom_call.1} parent=1 // pred_check_branch
      %11 = sbr.rel (0) target = $region5
    $region4: #{tpu_custom_call.1} parent=1 // pred_region
      _
    $region5: #{tpu_custom_call.1} parent=1 // pred_fallthru
      _
    // Predicated region
    $region6: #{tpu_custom_call.1} parent=1 // pred_check
      _
    $region7: #{tpu_custom_call.1} parent=1 // pred_check_branch
      %13 = sbr.rel (0) target = $region9
    $region8: #{tpu_custom_call.1} parent=1 // pred_region
      _
    $region9: #{tpu_custom_call.1} parent=1 // pred_fallthru
      _
    // Predicated region
    $region10: #{tpu_custom_call.1} parent=1 // pred_check
      _
    $region11: #{tpu_custom_call.1} parent=1 // pred_check_branch
      %15 = sbr.rel (0) target = $region13
    $region12: #{tpu_custom_call.1} parent=1 // pred_region
      _
    $region13: #{tpu_custom_call.1} parent=1 // pred_fallthru
      _
    // Predicated region
    $region14: #{tpu_custom_call.1} parent=1 // pred_check
      _
    $region15: #{tpu_custom_call.1} parent=1 // pred_check_branch
      %17 = sbr.rel (0) target = $region17
    $region16: #{tpu_custom_call.1} parent=1 // pred_region
      _
    $region17: #{tpu_custom_call.1} parent=1 // pred_fallthru
      _
    %v18 = vld [vmem:[%s0] sm:$0xff]
    %v19 = vld [vmem:[%s0 + $0x8] sm:$0xff]
    %v20 = vld [vmem:[%s1] sm:$0xff]
    %v21 = vld [vmem:[%s1 + $0x8] sm:$0xff]
    %v22 = vld [vmem:[%s1 + $0x10] sm:$0xff]
    %v23 = vld [vmem:[%s1 + $0x18] sm:$0xff]
    %vm24 = vcmask 261120
    %v26 = vsel %vm24, %v18, 0
    %v29 = vsel %vm24, %v19, 0
    %31 = vmatprep.subr.mxu0 0.0
    %32 = vmatpush1.msra.mxu0 0.0
    %33 = vmatprep.subr.mxu0 0.0
    %34 = vmatpush1.msra.mxu0 0.0
    %35 = vmatprep.subr.mxu0 0.0
    %36 = vmatpush1.msra.mxu0 0.0
    %37 = vmatprep.subr.mxu0 0.0
    %38 = vmatpush1.msra.mxu0 0.0
    %39 = vmatprep.subr.mxu0 0.0
    %40 = vmatpush1.msra.mxu0 0.0
    %41 = vmatprep.subr.mxu0 0.0
    %42 = vmatpush1.msra.mxu0 0.0
    %43 = vmatprep.subr.mxu0 0.0
    %44 = vmatpush1.msra.mxu0 0.0
    %45 = vmatprep.subr.mxu0 0.0
    %46 = vmatpush1.msra.mxu0 0.0
    %47 = vmatprep.subr.mxu0 0.0
    %48 = vmatpush1.msra.mxu0 0.0
    %49 = vmatprep.subr.mxu0 0.0
    %50 = vmatpush1.msra.mxu0 0.0
    %51 = vmatprep.subr.mxu0 0.0
    %52 = vmatpush1.msra.mxu0 0.0
    %53 = vmatprep.subr.mxu0 0.0
    %54 = vmatpush1.msra.mxu0 0.0
    %55 = vmatprep.subr.mxu0 0.0
    %56 = vmatpush1.msra.mxu0 %v23
    %57 = vmatprep.subr.mxu0 0.0
    %58 = vmatpush1.msra.mxu0 %v22
    %59 = vmatprep.subr.mxu0 0.0
    %60 = vmatpush1.msra.mxu0 %v21
    %61 = vmatprep.subr.mxu0 0.0
    %62 = vmatpush1.msra.mxu0 %v20
    %63 = vmatprep.subr.mxu0 0.0
    %64 = vmatpush2.msra.mxu0 0.0
    %65 = vmatprep.subr.mxu0 0.0
    %66 = vmatpush2.msra.mxu0 0.0
    %67 = vmatprep.subr.mxu0 0.0
    %68 = vmatpush2.msra.mxu0 0.0
    %69 = vmatprep.subr.mxu0 0.0
    %70 = vmatpush2.msra.mxu0 0.0
    %71 = vmatprep.subr.mxu0 0.0
    %72 = vmatpush2.msra.mxu0 0.0
    %73 = vmatprep.subr.mxu0 0.0
    %74 = vmatpush2.msra.mxu0 0.0
    %75 = vmatprep.subr.mxu0 0.0
    %76 = vmatpush2.msra.mxu0 0.0
    %77 = vmatprep.subr.mxu0 0.0
    %78 = vmatpush2.msra.mxu0 0.0
    %79 = vmatprep.subr.mxu0 0.0
    %80 = vmatpush2.msra.mxu0 0.0
    %81 = vmatprep.subr.mxu0 0.0
    %82 = vmatpush2.msra.mxu0 0.0
    %83 = vmatprep.subr.mxu0 0.0
    %84 = vmatpush2.msra.mxu0 0.0
    %85 = vmatprep.subr.mxu0 0.0
    %86 = vmatpush2.msra.mxu0 0.0
    %87 = vmatprep.subr.mxu0 0.0
    %88 = vmatpush2.msra.mxu0 0.0
    %89 = vmatprep.subr.mxu0 0.0
    %90 = vmatpush2.msra.mxu0 0.0
    %91 = vmatprep.subr.mxu0 0.0
    %92 = vmatpush2.msra.mxu0 0.0
    %93 = vmatprep.subr.mxu0 0.0
    %94 = vmatpush2.msra.mxu0 0.0
    %95 = vmatprep.mubr.f32.mxu0 0.0
    %96 = vmatmul.mubr.f32.gmra.mxu0 %v26
    %v97 = vpop.f32.mrf.mxu0
    %v98 = vadd.f32 0.0, %v97
    %v99 = vpop.f32.mrf.mxu0
    %100 = vmatprep.mubr.f32.mxu0 0.0
    %101 = vmatmul.mubr.f32.gmra.mxu0 %v29
    %v102 = vpop.f32.mrf.mxu0
    %v103 = vadd.f32 0.0, %v102
    %v104 = vpop.f32.mrf.mxu0
    %105 = vdwg.mxu0
    %v106 = vld [vmem:[%s2] sm:$0xff]
    %v107 = vld [vmem:[%s2 + $0x8] sm:$0xff]
    %v108 = vld [vmem:[%s2 + $0x10] sm:$0xff]
    %v109 = vld [vmem:[%s2 + $0x18] sm:$0xff]
    %110 = vmatprep.subr.mxu0 0.0
    %111 = vmatpush1.msra.mxu0 0.0
    %112 = vmatprep.subr.mxu0 0.0
    %113 = vmatpush1.msra.mxu0 0.0
    %114 = vmatprep.subr.mxu0 0.0
    %115 = vmatpush1.msra.mxu0 0.0
    %116 = vmatprep.subr.mxu0 0.0
    %117 = vmatpush1.msra.mxu0 0.0
    %118 = vmatprep.subr.mxu0 0.0
    %119 = vmatpush1.msra.mxu0 0.0
    %120 = vmatprep.subr.mxu0 0.0
    %121 = vmatpush1.msra.mxu0 0.0
    %122 = vmatprep.subr.mxu0 0.0
    %123 = vmatpush1.msra.mxu0 0.0
    %124 = vmatprep.subr.mxu0 0.0
    %125 = vmatpush1.msra.mxu0 0.0
    %126 = vmatprep.subr.mxu0 0.0
    %127 = vmatpush1.msra.mxu0 0.0
    %128 = vmatprep.subr.mxu0 0.0
    %129 = vmatpush1.msra.mxu0 0.0
    %130 = vmatprep.subr.mxu0 0.0
    %131 = vmatpush1.msra.mxu0 0.0
    %132 = vmatprep.subr.mxu0 0.0
    %133 = vmatpush1.msra.mxu0 0.0
    %134 = vmatprep.subr.mxu0 0.0
    %135 = vmatpush1.msra.mxu0 %v109
    %136 = vmatprep.subr.mxu0 0.0
    %137 = vmatpush1.msra.mxu0 %v108
    %138 = vmatprep.subr.mxu0 0.0
    %139 = vmatpush1.msra.mxu0 %v107
    %140 = vmatprep.subr.mxu0 0.0
    %141 = vmatpush1.msra.mxu0 %v106
    %142 = vmatprep.subr.mxu0 0.0
    %143 = vmatpush2.msra.mxu0 0.0
    %144 = vmatprep.subr.mxu0 0.0
    %145 = vmatpush2.msra.mxu0 0.0
    %146 = vmatprep.subr.mxu0 0.0
    %147 = vmatpush2.msra.mxu0 0.0
    %148 = vmatprep.subr.mxu0 0.0
    %149 = vmatpush2.msra.mxu0 0.0
    %150 = vmatprep.subr.mxu0 0.0
    %151 = vmatpush2.msra.mxu0 0.0
    %152 = vmatprep.subr.mxu0 0.0
    %153 = vmatpush2.msra.mxu0 0.0
    %154 = vmatprep.subr.mxu0 0.0
    %155 = vmatpush2.msra.mxu0 0.0
    %156 = vmatprep.subr.mxu0 0.0
    %157 = vmatpush2.msra.mxu0 0.0
    %158 = vmatprep.subr.mxu0 0.0
    %159 = vmatpush2.msra.mxu0 0.0
    %160 = vmatprep.subr.mxu0 0.0
    %161 = vmatpush2.msra.mxu0 0.0
    %162 = vmatprep.subr.mxu0 0.0
    %163 = vmatpush2.msra.mxu0 0.0
    %164 = vmatprep.subr.mxu0 0.0
    %165 = vmatpush2.msra.mxu0 0.0
    %166 = vmatprep.subr.mxu0 0.0
    %167 = vmatpush2.msra.mxu0 0.0
    %168 = vmatprep.subr.mxu0 0.0
    %169 = vmatpush2.msra.mxu0 0.0
    %170 = vmatprep.subr.mxu0 0.0
    %171 = vmatpush2.msra.mxu0 0.0
    %172 = vmatprep.subr.mxu0 0.0
    %173 = vmatpush2.msra.mxu0 0.0
    %174 = vmatprep.mubr.f32.mxu0 0.0
    %175 = vmatmul.mubr.f32.gmra.mxu0 %v26
    %v176 = vpop.f32.mrf.mxu0
    %v177 = vadd.f32 0.0, %v176
    %v178 = vpop.f32.mrf.mxu0
    %179 = vmatprep.mubr.f32.mxu0 0.0
    %180 = vmatmul.mubr.f32.gmra.mxu0 %v29
    %v181 = vpop.f32.mrf.mxu0
    %v182 = vadd.f32 0.0, %v181
    %v183 = vpop.f32.mrf.mxu0
    %184 = vdwg.mxu0
    %vm185 = vcmp.ge.f32.partialorder %v98, 0.0
    %vm186 = vcmp.ge.f32.partialorder %v103, 0.0
    %v187 = vsub.f32 0.0, %v98
    %v188 = vsub.f32 0.0, %v103
    %v189 = vsel %vm185, %v187, %v98
    %v190 = vsel %vm186, %v188, %v103
    %v191 = vmul.f32 %v189, 1.442695
    %v192 = vpow.pop %v191
    %v193 = vmul.f32 %v190, 1.442695
    %v194 = vpow.pop %v193
    %v195 = vsel %vm185, 1.0, %v192
    %v196 = vsel %vm186, 1.0, %v194
    %v197 = vadd.f32 %v192, 1.0
    %v198 = vadd.f32 %v194, 1.0
    %v199 = vrcp.pop %v197
    %v200 = vrcp.pop %v198
    %v201 = vmul.f32 %v195, %v199
    %v202 = vmul.f32 %v196, %v200
    %v203 = vmul.f32 %v201, %v98
    %v204 = vmul.f32 %v202, %v103
    %v205 = vmul.f32 %v203, %v177
    %v206 = vmul.f32 %v204, %v182
    %v207 = vld [vmem:[%s3] sm:$0xff]
    %v208 = vld [vmem:[%s3 + $0x8] sm:$0xff]
    %v209 = vld [vmem:[%s3 + $0x10] sm:$0xff]
    %v210 = vld [vmem:[%s3 + $0x18] sm:$0xff]
    %v211 = vld [vmem:[%s3 + $0x20] sm:$0xff]
    %v212 = vld [vmem:[%s3 + $0x28] sm:$0xff]
    %v213 = vld [vmem:[%s3 + $0x30] sm:$0xff]
    %v214 = vld [vmem:[%s3 + $0x38] sm:$0xff]
    %vm215 = vcmask 523264
    %v217 = vsel %vm215, %v205, 0
    %v220 = vsel %vm215, %v206, 0
    %222 = vmatprep.subr.mxu0 0.0
    %223 = vmatpush1.msra.mxu0 0.0
    %224 = vmatprep.subr.mxu0 0.0
    %225 = vmatpush1.msra.mxu0 0.0
    %226 = vmatprep.subr.mxu0 0.0
    %227 = vmatpush1.msra.mxu0 0.0
    %228 = vmatprep.subr.mxu0 0.0
    %229 = vmatpush1.msra.mxu0 0.0
    %230 = vmatprep.subr.mxu0 0.0
    %231 = vmatpush1.msra.mxu0 0.0
    %232 = vmatprep.subr.mxu0 0.0
    %233 = vmatpush1.msra.mxu0 0.0
    %234 = vmatprep.subr.mxu0 0.0
    %235 = vmatpush1.msra.mxu0 0.0
    %236 = vmatprep.subr.mxu0 0.0
    %237 = vmatpush1.msra.mxu0 0.0
    %238 = vmatprep.subr.mxu0 0.0
    %239 = vmatpush1.msra.mxu0 %v214
    %240 = vmatprep.subr.mxu0 0.0
    %241 = vmatpush1.msra.mxu0 %v213
    %242 = vmatprep.subr.mxu0 0.0
    %243 = vmatpush1.msra.mxu0 %v212
    %244 = vmatprep.subr.mxu0 0.0
    %245 = vmatpush1.msra.mxu0 %v211
    %246 = vmatprep.subr.mxu0 0.0
    %247 = vmatpush1.msra.mxu0 %v210
    %248 = vmatprep.subr.mxu0 0.0
    %249 = vmatpush1.msra.mxu0 %v209
    %250 = vmatprep.subr.mxu0 0.0
    %251 = vmatpush1.msra.mxu0 %v208
    %252 = vmatprep.subr.mxu0 0.0
    %253 = vmatpush1.msra.mxu0 %v207
    %254 = vmatprep.subr.mxu0 0.0
    %255 = vmatpush2.msra.mxu0 0.0
    %256 = vmatprep.subr.mxu0 0.0
    %257 = vmatpush2.msra.mxu0 0.0
    %258 = vmatprep.subr.mxu0 0.0
    %259 = vmatpush2.msra.mxu0 0.0
    %260 = vmatprep.subr.mxu0 0.0
    %261 = vmatpush2.msra.mxu0 0.0
    %262 = vmatprep.subr.mxu0 0.0
    %263 = vmatpush2.msra.mxu0 0.0
    %264 = vmatprep.subr.mxu0 0.0
    %265 = vmatpush2.msra.mxu0 0.0
    %266 = vmatprep.subr.mxu0 0.0
    %267 = vmatpush2.msra.mxu0 0.0
    %268 = vmatprep.subr.mxu0 0.0
    %269 = vmatpush2.msra.mxu0 0.0
    %270 = vmatprep.subr.mxu0 0.0
    %271 = vmatpush2.msra.mxu0 0.0
    %272 = vmatprep.subr.mxu0 0.0
    %273 = vmatpush2.msra.mxu0 0.0
    %274 = vmatprep.subr.mxu0 0.0
    %275 = vmatpush2.msra.mxu0 0.0
    %276 = vmatprep.subr.mxu0 0.0
    %277 = vmatpush2.msra.mxu0 0.0
    %278 = vmatprep.subr.mxu0 0.0
    %279 = vmatpush2.msra.mxu0 0.0
    %280 = vmatprep.subr.mxu0 0.0
    %281 = vmatpush2.msra.mxu0 0.0
    %282 = vmatprep.subr.mxu0 0.0
    %283 = vmatpush2.msra.mxu0 0.0
    %284 = vmatprep.subr.mxu0 0.0
    %285 = vmatpush2.msra.mxu0 0.0
    %286 = vmatprep.mubr.f32.mxu0 0.0
    %287 = vmatmul.mubr.f32.gmra.mxu0 %v217
    %v288 = vpop.f32.mrf.mxu0
    %v289 = vadd.f32 0.0, %v288
    %v290 = vpop.f32.mrf.mxu0
    %291 = vmatprep.mubr.f32.mxu0 0.0
    %292 = vmatmul.mubr.f32.gmra.mxu0 %v220
    %v293 = vpop.f32.mrf.mxu0
    %v294 = vadd.f32 0.0, %v293
    %v295 = vpop.f32.mrf.mxu0
    %296 = vdwg.mxu0
    %p297 = scmp.eq.s32.totalorder 0, 0
    // Predicated region
    $region18: #{tpu_custom_call.1} parent=1 // pred_check
      %p298 = pneg %p297
    $region19: #{tpu_custom_call.1} parent=1 // pred_check_branch
      %300 = sbr.rel (%p298) target = $region21
    $region20: #{tpu_custom_call.1} parent=1 // pred_region
      %301 = vst.msk [vmem:[#allocation2] sm:$0xff] %vm24, %v289
      %302 = vst.msk [vmem:[#allocation2 + $0x8] sm:$0xff] %vm24, %v294
    $region21: #{tpu_custom_call.1} parent=1 // pred_fallthru
      _
    %p303 = scmp.ne.s32.totalorder 0, 0
    // Predicated region
    $region22: #{tpu_custom_call.1} parent=1 // pred_check
      %p304 = pneg %p303
    $region23: #{tpu_custom_call.1} parent=1 // pred_check_branch
      %306 = sbr.rel (%p304) target = $region25
    $region24: #{tpu_custom_call.1} parent=1 // pred_region
      %v307 = vld [vmem:[#allocation2] sm:$0xff]
      %v308 = vld [vmem:[#allocation2 + $0x8] sm:$0xff]
      %v309 = vadd.f32 %v307, %v289
      %v310 = vadd.f32 %v308, %v294
      %311 = vst.msk [vmem:[#allocation2] sm:$0xff] %vm24, %v309
      %312 = vst.msk [vmem:[#allocation2 + $0x8] sm:$0xff] %vm24, %v310
    $region25: #{tpu_custom_call.1} parent=1 // pred_fallthru
      _
    // Predicated region
    $region26: #{tpu_custom_call.1} parent=1 // pred_check
      %p313 = pneg %p297
    $region27: #{tpu_custom_call.1} parent=1 // pred_check_branch
      %315 = sbr.rel (%p313) target = $region29
    $region28: #{tpu_custom_call.1} parent=1 // pred_region
      %v316 = vld [vmem:[#allocation2] sm:$0xff]
      %v317 = vld [vmem:[#allocation2 + $0x8] sm:$0xff]
      %318 = vst.msk [vmem:[#allocation3] sm:$0xff] %vm24, %v316
      %319 = vst.msk [vmem:[#allocation3 + $0x8] sm:$0xff] %vm24, %v317
    $region29: #{tpu_custom_call.1} parent=1 // pred_fallthru
      _
    // Predicated region
    $region30: #{tpu_custom_call.1} parent=1 // pred_check
      _
    $region31: #{tpu_custom_call.1} parent=1 // pred_check_branch
      %321 = sbr.rel (0) target = $region33
    $region32: #{tpu_custom_call.1} parent=1 // pred_region
      %s323 = ssub.s32 256, 256
      %324 = vsyncadd [#allocation4], %s323
      %s325 = sshll.u32 [#allocation3], 4
      %s326 = int_to_ptr.vmem [resolvable:$true] %s325
      %331 = dma.vmem_to_hbm [thread:$0]  %s326, 256, %s4, [#allocation4], 128, 128, 8
    $region33: #{tpu_custom_call.1} parent=1 // pred_fallthru
      _
    // Predicated region
    $region34: #{tpu_custom_call.1} parent=1 // pred_check
      _
    $region35: #{tpu_custom_call.1} parent=1 // pred_check_branch
      %333 = sbr.rel (0) target = $region37
    $region36: #{tpu_custom_call.1} parent=1 // pred_region
      %334 = dma.done [#allocation4], 256
    $region37: #{tpu_custom_call.1} parent=1 // pred_fallthru
      _
    %335 = vsyncpa [#allocation4], 1

</llo_original>
